<compile_context>
chip_gen: v5e
topology: v5e:2x2
jax: 0.10.0
libtpu: 0.0.40
codegen_flags: <defaults>
</compile_context>

<pallas_src>
import jax
import jax.numpy as jnp
from jax import lax
from jax.experimental import pallas as pl
from jax.experimental.pallas import tpu as pltpu


def _make_fusion_kernel(num_modalities: int, feat: int):
    # Contract x_m[TB, F] (dim 1) with w_m[F_out, F] (dim 1)  ==  x_m @ w_m.T
    dn = (((1,), (1,)), ((), ()))

    def kernel(*refs):
        x_refs = refs[:num_modalities]            # each (TB, F)
        w_ref = refs[num_modalities]              # (F_out, M*F)  resident
        b_ref = refs[num_modalities + 1]          # (1, F_out)    resident
        o_ref = refs[num_modalities + 2]          # (TB, F_out)

        # Fold the bias into the accumulator init (broadcasts over batch tile).
        acc = b_ref[...].astype(jnp.float32)
        for m, x_ref in enumerate(x_refs):
            # Static, lane-aligned column slice of the resident weight block.
            w_m = w_ref[:, m * feat:(m + 1) * feat]        # (F_out, F)
            acc = acc + lax.dot_general(
                x_ref[...], w_m, dn, preferred_element_type=jnp.float32)
        o_ref[...] = acc.astype(o_ref.dtype)

    return kernel


def fully_connected_fusion(inputs, weight, bias, *, batch_tile: int = 512):
    """inputs: list of [B, F] arrays; weight: [F, M*F] (PyTorch layout); bias: [F]."""
    num_modalities = len(inputs)
    B, feat = inputs[0].shape
    out_f, in_f = weight.shape
    assert in_f == num_modalities * feat, "weight in_features must equal M*F"

    b2d = bias.reshape(1, out_f)                  # (1, F_out) lane-dense block
    dtype = inputs[0].dtype

    # Batch tile: whole batch if small, else 512 rows (sweepable).
    tb = B if B <= batch_tile else batch_tile
    grid = (pl.cdiv(B, tb),)

    x_specs = [pl.BlockSpec((tb, feat), lambda i: (i, 0))
               for _ in range(num_modalities)]
    w_spec = pl.BlockSpec((out_f, in_f), lambda i: (0, 0))   # resident weight
    b_spec = pl.BlockSpec((1, out_f), lambda i: (0, 0))      # resident bias
    o_spec = pl.BlockSpec((tb, out_f), lambda i: (i, 0))

    itemsize = jnp.dtype(dtype).itemsize
    bytes_accessed = (num_modalities * B * feat * itemsize          # activations in
                      + out_f * in_f * jnp.dtype(weight.dtype).itemsize
                      + out_f * jnp.dtype(bias.dtype).itemsize
                      + B * out_f * itemsize)                       # output
    cost = pl.CostEstimate(flops=2 * B * in_f * out_f,
                           transcendentals=0,
                           bytes_accessed=bytes_accessed)

    # VMEM budget: double-buffered activation/output tiles + resident weight/bias,
    # with 2x headroom; clamp well below the v7x 64 MiB physical ceiling.
    vmem_needed = 4 * (2 * num_modalities * tb * feat     # x tiles (dbl-buffered)
                       + 2 * tb * out_f                   # out tiles
                       + 2 * out_f * in_f                 # weight
                       + 2 * out_f)                       # bias
    vmem_limit = int(min(max(2 * vmem_needed, 4 << 20), 48 << 20))

    return pl.pallas_call(
        _make_fusion_kernel(num_modalities, feat),
        out_shape=jax.ShapeDtypeStruct((B, out_f), dtype),
        grid_spec=pltpu.PrefetchScalarGridSpec(
            num_scalar_prefetch=0,
            grid=grid,
            in_specs=x_specs + [w_spec, b_spec],
            out_specs=o_spec,
        ),
        compiler_params=pltpu.CompilerParams(
            dimension_semantics=("parallel",),
            vmem_limit_bytes=vmem_limit,
        ),
        cost_estimate=cost,
    )(*inputs, weight, b2d)


if __name__ == "__main__":
    # Small shapes consistent with the module.
    number_of_modalities = 2
    vectorized_feature_length = 128
    batch = 8

    key = jax.random.PRNGKey(0)
    k_w, k_b, *k_inputs = jax.random.split(key, 2 + number_of_modalities)

    in_features = vectorized_feature_length * number_of_modalities
    out_features = vectorized_feature_length

    # Deterministic init mirroring nn.Linear: U(-1/sqrt(in), 1/sqrt(in)).
    bound = 1.0 / jnp.sqrt(jnp.float32(in_features))
    weight = jax.random.uniform(
        k_w, (out_features, in_features), jnp.float32, minval=-bound, maxval=bound
    )
    bias = jax.random.uniform(
        k_b, (out_features,), jnp.float32, minval=-bound, maxval=bound
    )

    inputs = [
        jax.random.normal(k, (batch, vectorized_feature_length), jnp.float32)
        for k in k_inputs
    ]

    out = fully_connected_fusion(inputs, weight, bias)
    out = jax.block_until_ready(out)

    # Reference check in plain JAX (matches the PyTorch forward).
    ref = jnp.concatenate(inputs, axis=1) @ weight.T + bias
    assert out.shape == (batch, vectorized_feature_length)
    assert jnp.allclose(out, ref, atol=1e-4, rtol=1e-4)

    print("KERNEL_OK")
</pallas_src>

<mosaic_0001>
module attributes {stable_mosaic.version = 11 : i64} {
  func.func @kernel(%arg0: i32, %arg1: memref<8x128xf32, #tpu.memory_space<vmem>>, %arg2: memref<8x128xf32, #tpu.memory_space<vmem>>, %arg3: memref<128x256xf32, #tpu.memory_space<vmem>>, %arg4: memref<1x128xf32, #tpu.memory_space<vmem>>, %arg5: memref<8x128xf32, #tpu.memory_space<vmem>>) attributes {dimension_semantics = [#tpu.dimension_semantics<parallel>], iteration_bounds = array<i64: 1>, scalar_prefetch = 0 : i64, scratch_operands = 0 : i64, tpu.core_type = #tpu.core_type<tc>, window_params = [{transform_indices = @transform_0, window_bounds = array<i64: 8, 128>}, {transform_indices = @transform_1, window_bounds = array<i64: 8, 128>}, {pipeline_mode = #tpu.pipeline_mode<synchronous>, transform_indices = @transform_2, window_bounds = array<i64: 128, 256>}, {pipeline_mode = #tpu.pipeline_mode<synchronous>, transform_indices = @transform_3, window_bounds = array<i64: 1, 128>}, {transform_indices = @transform_4, window_bounds = array<i64: 8, 128>}]} {
    %c0 = arith.constant 0 : index
    %c0_0 = arith.constant 0 : index
    %0 = vector.load %arg4[%c0, %c0_0] : memref<1x128xf32, #tpu.memory_space<vmem>>, vector<1x128xf32>
    %c0_1 = arith.constant 0 : index
    %c0_2 = arith.constant 0 : index
    %1 = vector.load %arg3[%c0_1, %c0_2] : memref<128x256xf32, #tpu.memory_space<vmem>>, vector<128x128xf32>
    %c0_3 = arith.constant 0 : index
    %c0_4 = arith.constant 0 : index
    %2 = vector.load %arg1[%c0_3, %c0_4] : memref<8x128xf32, #tpu.memory_space<vmem>>, vector<8x128xf32>
    %cst = arith.constant dense<0.000000e+00> : vector<8x128xf32>
    %3 = tpu.matmul %2, %1, %cst {dimension_numbers = #tpu.dot_dimension_numbers<[1], [1], [0], [0], [0, 0, 1, 0], [], []>} : vector<8x128xf32>, vector<128x128xf32>, vector<8x128xf32> -> vector<8x128xf32>
    %4 = vector.broadcast %0 : vector<1x128xf32> to vector<8x128xf32>
    %5 = arith.addf %4, %3 : vector<8x128xf32>
    %c0_5 = arith.constant 0 : index
    %c128 = arith.constant 128 : index
    %6 = vector.load %arg3[%c0_5, %c128] : memref<128x256xf32, #tpu.memory_space<vmem>>, vector<128x128xf32>
    %c0_6 = arith.constant 0 : index
    %c0_7 = arith.constant 0 : index
    %7 = vector.load %arg2[%c0_6, %c0_7] : memref<8x128xf32, #tpu.memory_space<vmem>>, vector<8x128xf32>
    %cst_8 = arith.constant dense<0.000000e+00> : vector<8x128xf32>
    %8 = tpu.matmul %7, %6, %cst_8 {dimension_numbers = #tpu.dot_dimension_numbers<[1], [1], [0], [0], [0, 0, 1, 0], [], []>} : vector<8x128xf32>, vector<128x128xf32>, vector<8x128xf32> -> vector<8x128xf32>
    %9 = arith.addf %5, %8 : vector<8x128xf32>
    %c0_9 = arith.constant 0 : index
    %c0_10 = arith.constant 0 : index
    %10 = vector.load %arg5[%c0_9, %c0_10] : memref<8x128xf32, #tpu.memory_space<vmem>>, vector<8x128xf32>
    tpu.vector_store %arg5[%c0_9, %c0_10], %9 {strides = array<i32>} : memref<8x128xf32, #tpu.memory_space<vmem>>, vector<8x128xf32>,
    return
  }
  func.func @transform_0(%arg0: i32) -> (i32, i32) {
    %c0_i32 = arith.constant 0 : i32
    %c0_i32_0 = arith.constant 0 : i32
    return %arg0, %c0_i32 : i32, i32
  }
  func.func @transform_1(%arg0: i32) -> (i32, i32) {
    %c0_i32 = arith.constant 0 : i32
    %c0_i32_0 = arith.constant 0 : i32
    return %arg0, %c0_i32 : i32, i32
  }
  func.func @transform_2(%arg0: i32) -> (i32, i32) {
    %c0_i32 = arith.constant 0 : i32
    %c0_i32_0 = arith.constant 0 : i32
    %c0_i32_1 = arith.constant 0 : i32
    return %c0_i32, %c0_i32_0 : i32, i32
  }
  func.func @transform_3(%arg0: i32) -> (i32, i32) {
    %c0_i32 = arith.constant 0 : i32
    %c0_i32_0 = arith.constant 0 : i32
    %c0_i32_1 = arith.constant 0 : i32
    return %c0_i32, %c0_i32_0 : i32, i32
  }
  func.func @transform_4(%arg0: i32) -> (i32, i32) {
    %c0_i32 = arith.constant 0 : i32
    %c0_i32_0 = arith.constant 0 : i32
    return %arg0, %c0_i32 : i32, i32
  }
}

</mosaic_0001>

<llo_original>
// kernel: tpu_custom_call.1
$region0: #{tpu_custom_call.1}
  #allocation0 [shape = 'u32[]', space=smem, size = 0x4, offset = 0x4, fixed_abs, tag = 'smem constant byte address 0x4 - core index']
  #allocation1 [shape = 'u32[72,128]{1,0:T(1,128)}', space=vmem, size = 0x9000, scoped, tag = 'internal scratch']
  %s0 = inlined_call_operand.hbm [shape: f32[8,128], index: 0, kind: input, shape index: {}]
  %s1 = inlined_call_operand.hbm [shape: f32[8,128], index: 1, kind: input, shape index: {}]
  %s2 = inlined_call_operand.hbm [shape: f32[128,256], index: 2, kind: input, shape index: {}]
  %s3 = inlined_call_operand.vmem [shape: f32[1,128], index: 3, kind: input, shape index: {}]
  %s4 = inlined_call_operand.hbm [shape: f32[8,128], index: 4, kind: output, shape index: {}]
  %s5 = sld [smem:[#allocation0]]
  $region38: #{tpu_custom_call.1} parent=0
    _
  %s7 = ssub.s32 1, %s5
  %s8 = scalar_select 0, %s7, %s5
  $region1: #{tpu_custom_call.1} parent=0
    #allocation2 [shape = 'u8[4096]{0}', space=vmem, size = 0x1000, scoped, tag = 'input window, operand 0, single buffered']
    #allocation3 [shape = 's32[1]{0}', space=sflag, size = 0x4, scoped, tag = 'scoped memory for tpu_custom_call.1']
    #allocation4 [shape = 's32[1]{0}', space=sflag, size = 0x4, scoped, tag = 'scoped memory for tpu_custom_call.1']
    #allocation5 [shape = 'u8[4096]{0}', space=vmem, size = 0x1000, scoped, tag = 'input window, operand 1, single buffered']
    #allocation6 [shape = 's32[1]{0}', space=sflag, size = 0x4, scoped, tag = 'scoped memory for tpu_custom_call.1']
    #allocation7 [shape = 'u8[131072]{0}', space=vmem, size = 0x20000, scoped, tag = 'input window, operand 2, single buffered']
    #allocation8 [shape = 'u8[4096]{0}', space=vmem, size = 0x1000, scoped, tag = 'output window, operand 0, single buffered']
    %9 = vsyncpa [#allocation3], 0
    %10 = vsyncpa [#allocation6], 0
    %11 = vsyncpa [#allocation4], 0
    // Predicated region
    $region2: #{tpu_custom_call.1} parent=1 // pred_check
      _
    $region3: #{tpu_custom_call.1} parent=1 // pred_check_branch
      %13 = sbr.rel (0) target = $region5
    $region4: #{tpu_custom_call.1} parent=1 // pred_region
      %15 = vsyncadd [#allocation3], 0
      %s17 = sshll.u32 %s0, 4
      %s18 = int_to_ptr.hbm [resolvable:$true] %s17
      %s19 = sshll.u32 [#allocation2], 4
      %s20 = int_to_ptr.vmem [resolvable:$true] %s19
      %22 = dma.hbm_to_vmem [thread:$0]  %s18, 128, %s20, [#allocation3]
    $region5: #{tpu_custom_call.1} parent=1 // pred_fallthru
      _
    // Predicated region
    $region6: #{tpu_custom_call.1} parent=1 // pred_check
      _
    $region7: #{tpu_custom_call.1} parent=1 // pred_check_branch
      %24 = sbr.rel (0) target = $region9
    $region8: #{tpu_custom_call.1} parent=1 // pred_region
      %26 = vsyncadd [#allocation6], 0
      %s28 = sshll.u32 %s1, 4
      %s29 = int_to_ptr.hbm [resolvable:$true] %s28
      %s30 = sshll.u32 [#allocation5], 4
      %s31 = int_to_ptr.vmem [resolvable:$true] %s30
      %33 = dma.hbm_to_vmem [thread:$0]  %s29, 128, %s31, [#allocation6]
    $region9: #{tpu_custom_call.1} parent=1 // pred_fallthru
      _
    // Predicated region
    $region10: #{tpu_custom_call.1} parent=1 // pred_check
      _
    $region11: #{tpu_custom_call.1} parent=1 // pred_check_branch
      %35 = sbr.rel (0) target = $region13
    $region12: #{tpu_custom_call.1} parent=1 // pred_region
      %37 = vsyncadd [#allocation6], 0
      %s38 = sshll.u32 %s2, 4
      %s39 = int_to_ptr.hbm [resolvable:$true] %s38
      %s40 = sshll.u32 [#allocation7], 4
      %s41 = int_to_ptr.vmem [resolvable:$true] %s40
      %46 = dma.hbm_to_vmem [thread:$0]  %s39, 4096, %s41, [#allocation6], 256, 256, 16
    $region13: #{tpu_custom_call.1} parent=1 // pred_fallthru
      _
    // Predicated region
    $region14: #{tpu_custom_call.1} parent=1 // pred_check
      _
    $region15: #{tpu_custom_call.1} parent=1 // pred_check_branch
      %48 = sbr.rel (0) target = $region17
    $region16: #{tpu_custom_call.1} parent=1 // pred_region
      _
    $region17: #{tpu_custom_call.1} parent=1 // pred_fallthru
      _
    // Predicated region
    $region18: #{tpu_custom_call.1} parent=1 // pred_check
      _
    $region19: #{tpu_custom_call.1} parent=1 // pred_check_branch
      %50 = sbr.rel (0) target = $region21
    $region20: #{tpu_custom_call.1} parent=1 // pred_region
      %52 = dma.done [#allocation3], 128
    $region21: #{tpu_custom_call.1} parent=1 // pred_fallthru
      _
    // Predicated region
    $region22: #{tpu_custom_call.1} parent=1 // pred_check
      _
    $region23: #{tpu_custom_call.1} parent=1 // pred_check_branch
      %54 = sbr.rel (0) target = $region25
    $region24: #{tpu_custom_call.1} parent=1 // pred_region
      %56 = dma.done [#allocation6], 128
    $region25: #{tpu_custom_call.1} parent=1 // pred_fallthru
      _
    // Predicated region
    $region26: #{tpu_custom_call.1} parent=1 // pred_check
      _
    $region27: #{tpu_custom_call.1} parent=1 // pred_check_branch
      %58 = sbr.rel (0) target = $region29
    $region28: #{tpu_custom_call.1} parent=1 // pred_region
      %60 = dma.done [#allocation6], 4096
    $region29: #{tpu_custom_call.1} parent=1 // pred_fallthru
      _
    %v61 = vld [vmem:[%s3] sm:$0x1]
    %v62 = vld [vmem:[#allocation7] sm:$0xff]
    %v63 = vld [vmem:[#allocation7 + $0x10] sm:$0xff]
    %v64 = vld [vmem:[#allocation7 + $0x20] sm:$0xff]
    %v65 = vld [vmem:[#allocation7 + $0x30] sm:$0xff]
    %v66 = vld [vmem:[#allocation7 + $0x40] sm:$0xff]
    %v67 = vld [vmem:[#allocation7 + $0x50] sm:$0xff]
    %v68 = vld [vmem:[#allocation7 + $0x60] sm:$0xff]
    %v69 = vld [vmem:[#allocation7 + $0x70] sm:$0xff]
    %v70 = vld [vmem:[#allocation7 + $0x80] sm:$0xff]
    %v71 = vld [vmem:[#allocation7 + $0x90] sm:$0xff]
    %v72 = vld [vmem:[#allocation7 + $0xa0] sm:$0xff]
    %v73 = vld [vmem:[#allocation7 + $0xb0] sm:$0xff]
    %v74 = vld [vmem:[#allocation7 + $0xc0] sm:$0xff]
    %v75 = vld [vmem:[#allocation7 + $0xd0] sm:$0xff]
    %v76 = vld [vmem:[#allocation7 + $0xe0] sm:$0xff]
    %v77 = vld [vmem:[#allocation7 + $0xf0] sm:$0xff]
    %v78 = vld [vmem:[#allocation2] sm:$0xff]
    %79 = vmatpush.xpose.msra.mxu0 %v77
    %80 = vmatpush.xpose.msra.mxu0 %v76
    %81 = vmatpush.xpose.msra.mxu0 %v75
    %82 = vmatpush.xpose.msra.mxu0 %v74
    %83 = vmatpush.xpose.msra.mxu0 %v73
    %84 = vmatpush.xpose.msra.mxu0 %v72
    %85 = vmatpush.xpose.msra.mxu0 %v71
    %86 = vmatpush.xpose.msra.mxu0 %v70
    %87 = vmatpush.xpose.msra.mxu0 %v69
    %88 = vmatpush.xpose.msra.mxu0 %v68
    %89 = vmatpush.xpose.msra.mxu0 %v67
    %90 = vmatpush.xpose.msra.mxu0 %v66
    %91 = vmatpush.xpose.msra.mxu0 %v65
    %92 = vmatpush.xpose.msra.mxu0 %v64
    %93 = vmatpush.xpose.msra.mxu0 %v63
    %94 = vmatpush.xpose.msra.mxu0 %v62
    %95 = vmatmul.f32.gmra.mxu0 %v78
    %v96 = vpop.f32.mrf.mxu0
    %v97 = vadd.f32 0.0, %v96
    %98 = vdwg.mxu0
    %v100 = vperm.slane %v61, 0
    %v102 = vadd.f32 %v100, %v97
    %v103 = vld [vmem:[#allocation7 + $0x8] sm:$0xff]
    %v104 = vld [vmem:[#allocation7 + $0x18] sm:$0xff]
    %v105 = vld [vmem:[#allocation7 + $0x28] sm:$0xff]
    %v106 = vld [vmem:[#allocation7 + $0x38] sm:$0xff]
    %v107 = vld [vmem:[#allocation7 + $0x48] sm:$0xff]
    %v108 = vld [vmem:[#allocation7 + $0x58] sm:$0xff]
    %v109 = vld [vmem:[#allocation7 + $0x68] sm:$0xff]
    %v110 = vld [vmem:[#allocation7 + $0x78] sm:$0xff]
    %v111 = vld [vmem:[#allocation7 + $0x88] sm:$0xff]
    %v112 = vld [vmem:[#allocation7 + $0x98] sm:$0xff]
    %v113 = vld [vmem:[#allocation7 + $0xa8] sm:$0xff]
    %v114 = vld [vmem:[#allocation7 + $0xb8] sm:$0xff]
    %v115 = vld [vmem:[#allocation7 + $0xc8] sm:$0xff]
    %v116 = vld [vmem:[#allocation7 + $0xd8] sm:$0xff]
    %v117 = vld [vmem:[#allocation7 + $0xe8] sm:$0xff]
    %v118 = vld [vmem:[#allocation7 + $0xf8] sm:$0xff]
    %v119 = vld [vmem:[#allocation5] sm:$0xff]
    %120 = vmatpush.xpose.msra.mxu0 %v118
    %121 = vmatpush.xpose.msra.mxu0 %v117
    %122 = vmatpush.xpose.msra.mxu0 %v116
    %123 = vmatpush.xpose.msra.mxu0 %v115
    %124 = vmatpush.xpose.msra.mxu0 %v114
    %125 = vmatpush.xpose.msra.mxu0 %v113
    %126 = vmatpush.xpose.msra.mxu0 %v112
    %127 = vmatpush.xpose.msra.mxu0 %v111
    %128 = vmatpush.xpose.msra.mxu0 %v110
    %129 = vmatpush.xpose.msra.mxu0 %v109
    %130 = vmatpush.xpose.msra.mxu0 %v108
    %131 = vmatpush.xpose.msra.mxu0 %v107
    %132 = vmatpush.xpose.msra.mxu0 %v106
    %133 = vmatpush.xpose.msra.mxu0 %v105
    %134 = vmatpush.xpose.msra.mxu0 %v104
    %135 = vmatpush.xpose.msra.mxu0 %v103
    %136 = vmatmul.f32.gmra.mxu0 %v119
    %v137 = vpop.f32.mrf.mxu0
    %v138 = vadd.f32 0.0, %v137
    %139 = vdwg.mxu0
    %v140 = vadd.f32 %v102, %v138
    %141 = vst [vmem:[#allocation8] sm:$0xff] %v140
    // Predicated region
    $region30: #{tpu_custom_call.1} parent=1 // pred_check
      _
    $region31: #{tpu_custom_call.1} parent=1 // pred_check_branch
      %143 = sbr.rel (0) target = $region33
    $region32: #{tpu_custom_call.1} parent=1 // pred_region
      %145 = vsyncadd [#allocation4], 0
      %s147 = sshll.u32 [#allocation8], 4
      %s148 = int_to_ptr.vmem [resolvable:$true] %s147
      %s149 = sshll.u32 %s4, 4
      %s150 = int_to_ptr.hbm [resolvable:$true] %s149
      %152 = dma.vmem_to_hbm [thread:$0]  %s148, 128, %s150, [#allocation4]
    $region33: #{tpu_custom_call.1} parent=1 // pred_fallthru
      _
    // Predicated region
    $region34: #{tpu_custom_call.1} parent=1 // pred_check
      _
    $region35: #{tpu_custom_call.1} parent=1 // pred_check_branch
      %154 = sbr.rel (0) target = $region37
    $region36: #{tpu_custom_call.1} parent=1 // pred_region
      %156 = dma.done [#allocation4], 128
    $region37: #{tpu_custom_call.1} parent=1 // pred_fallthru
      _
    %157 = vsyncpa [#allocation3], 1
    %158 = vsyncpa [#allocation6], 1
    %159 = vsyncpa [#allocation4], 1

</llo_original>
